<compile_context>
chip_gen: v7x
topology: tpu7x:2x2x1
jax: 0.10.0
libtpu: 0.0.40
codegen_flags: <defaults>
</compile_context>

<pallas_src>
import math

import jax
import jax.numpy as jnp
from jax.experimental import pallas as pl
from jax.experimental.pallas import tpu as pltpu


_LANES = 1024                          # lane-dense slab width (multiple of 128)
_BLOCK_BYTES = 4 * 1024 * 1024         # ~4 MiB per array per block
_VMEM_LIMIT_BYTES = 32 * 1024 * 1024   # 3 arrays x 2 buffers x 4 MiB = 24 MiB
_SMALL_TOTAL = 1 << 16                 # below this, fused XLA beats kernel launch


def _round_up(x, m):
    return ((x + m - 1) // m) * m


def _mask_kernel(mask_ref, adj_ref, out_ref):
    # Elementwise hot path: (mask + 1e-7) * adj, computed in the output dtype
    # (torch runs the op in the promoted input dtype).
    m = mask_ref[...].astype(out_ref.dtype)
    a = adj_ref[...].astype(out_ref.dtype)
    out_ref[...] = (m + jnp.asarray(1e-7, out_ref.dtype)) * a


def mask_forward(masks, adjs):
    """masks: [G, N, N] stored adjacency masks (the module's `adjs` ctor arg).
    adjs:  [G, N, N] input adjacency matrices (forward's `adj` iterable).
    Returns the stacked [G, N, N] result: out[g] == (masks[g] + 1e-7) * adjs[g].
    Index lazily (result[g]) if a per-graph list is required.
    """
    assert masks.shape == adjs.shape, "mask / adj shape mismatch"
    orig_shape = adjs.shape
    total = math.prod(orig_shape)

    out_dtype = jnp.result_type(masks.dtype, adjs.dtype)
    if not jnp.issubdtype(out_dtype, jnp.floating):
        # torch promotes integer/bool inputs to float via the 1e-7 scalar.
        out_dtype = jnp.float32

    if total == 0:
        return jnp.zeros(orig_shape, out_dtype)

    if total < _SMALL_TOTAL:
        # Launch / pipeline setup of a pallas_call dominates at this scale.
        return ((masks.astype(out_dtype) + jnp.asarray(1e-7, out_dtype))
                * adjs.astype(out_dtype))

    # ---- Choose a 2D view with no pad / slice copies -------------------------
    if total % _LANES == 0:
        rows, cols = total // _LANES, _LANES              # lane-dense slab
    elif masks.ndim >= 2:
        rows, cols = orig_shape[0], math.prod(orig_shape[1:])  # [G, N*N] view
    else:
        rows, cols = 1, total
    m2 = masks.reshape(rows, cols)
    a2 = adjs.reshape(rows, cols)

    # ---- Block shape: ~4 MiB per array, lane-dense where possible ------------
    # Lane (last) block dim: a multiple of 128 (ragged tail handled by Pallas'
    # masked writeback) or the full dim when the view is narrower than a slab.
    block_cols = _LANES if cols >= _LANES else cols
    max_item = max(masks.dtype.itemsize, adjs.dtype.itemsize,
                   jnp.dtype(out_dtype).itemsize)
    target_rows = max(8, _BLOCK_BYTES // (block_cols * max_item))
    if rows <= target_rows:
        block_rows = rows                      # full dim (always legal)
    else:
        block_rows = _round_up(target_rows, 8)  # sublane-aligned, ragged tail ok

    grid_r = pl.cdiv(rows, block_rows)
    grid_c = pl.cdiv(cols, block_cols)
    # v7x has two TensorCores: never collapse to a single grid step when the
    # work is splittable, so the "parallel" axes can shard across both cores.
    if grid_r * grid_c == 1 and rows > 8:
        block_rows = _round_up(pl.cdiv(rows, 2), 8)
        grid_r = pl.cdiv(rows, block_rows)

    out2 = pl.pallas_call(
        _mask_kernel,
        out_shape=jax.ShapeDtypeStruct((rows, cols), out_dtype),
        grid=(grid_r, grid_c),
        in_specs=[
            pl.BlockSpec((block_rows, block_cols), lambda i, j: (i, j)),
            pl.BlockSpec((block_rows, block_cols), lambda i, j: (i, j)),
        ],
        out_specs=pl.BlockSpec((block_rows, block_cols), lambda i, j: (i, j)),
        compiler_params=pltpu.CompilerParams(
            dimension_semantics=("parallel", "parallel"),
            vmem_limit_bytes=_VMEM_LIMIT_BYTES,
        ),
        cost_estimate=pl.CostEstimate(
            flops=2 * total,
            bytes_accessed=total * (masks.dtype.itemsize
                                    + adjs.dtype.itemsize
                                    + jnp.dtype(out_dtype).itemsize),
            transcendentals=0,
        ),
    )(m2, a2)

    # Exact reshape back (view sizes match exactly — no slicing needed).
    return out2.reshape(orig_shape)


if __name__ == "__main__":
    key = jax.random.PRNGKey(0)
    keys = jax.random.split(key, 6)

    def _check(masks, adjs):
        out = jax.block_until_ready(mask_forward(masks, adjs))
        ref = (masks + jnp.float32(1e-7)) * adjs
        assert out.shape == masks.shape
        assert jnp.allclose(out, ref, atol=1e-6, rtol=1e-6)
        return out

    # 1) Module's typical regime: G=3 graphs of 16x16 adjacency (XLA fast path).
    G, N = 3, 16
    masks = (jax.random.uniform(keys[0], (G, N, N)) > 0.5).astype(jnp.float32)
    adjs = jax.random.normal(keys[1], (G, N, N), dtype=jnp.float32)
    _check(masks, adjs)

    # 2) Lane-dense slab path (total % 1024 == 0), split into >=2 grid steps.
    G, N = 4, 128
    masks = (jax.random.uniform(keys[2], (G, N, N)) > 0.5).astype(jnp.float32)
    adjs = jax.random.normal(keys[3], (G, N, N), dtype=jnp.float32)
    _check(masks, adjs)

    # 3) Ragged path (total % 1024 != 0): no pad/slice, masked tail blocks.
    G, N = 5, 120
    masks = (jax.random.uniform(keys[4], (G, N, N)) > 0.5).astype(jnp.float32)
    adjs = jax.random.normal(keys[5], (G, N, N), dtype=jnp.float32)
    _check(masks, adjs)

    print("KERNEL_OK")
</pallas_src>

<mosaic_0001>
module attributes {stable_mosaic.version = 11 : i64} {
  func.func @_mask_kernel(%arg0: i32, %arg1: i32, %arg2: memref<32x1024xf32, #tpu.memory_space<vmem>>, %arg3: memref<32x1024xf32, #tpu.memory_space<vmem>>, %arg4: memref<32x1024xf32, #tpu.memory_space<vmem>>) attributes {dimension_semantics = [#tpu.dimension_semantics<parallel>, #tpu.dimension_semantics<parallel>], iteration_bounds = array<i64: 2, 1>, scalar_prefetch = 0 : i64, scratch_operands = 0 : i64, tpu.core_type = #tpu.core_type<tc>, window_params = [{transform_indices = @transform_0, window_bounds = array<i64: 32, 1024>}, {transform_indices = @transform_1, window_bounds = array<i64: 32, 1024>}, {transform_indices = @transform_2, window_bounds = array<i64: 32, 1024>}]} {
    %c0 = arith.constant 0 : index
    %c0_0 = arith.constant 0 : index
    %0 = vector.load %arg2[%c0, %c0_0] : memref<32x1024xf32, #tpu.memory_space<vmem>>, vector<32x1024xf32>
    %c0_1 = arith.constant 0 : index
    %c0_2 = arith.constant 0 : index
    %1 = vector.load %arg3[%c0_1, %c0_2] : memref<32x1024xf32, #tpu.memory_space<vmem>>, vector<32x1024xf32>
    %cst = arith.constant 1.000000e-07 : f32
    %2 = vector.broadcast %cst : f32 to vector<32x1024xf32>
    %3 = arith.addf %0, %2 : vector<32x1024xf32>
    %4 = arith.mulf %3, %1 : vector<32x1024xf32>
    %c0_3 = arith.constant 0 : index
    %c0_4 = arith.constant 0 : index
    %5 = vector.load %arg4[%c0_3, %c0_4] : memref<32x1024xf32, #tpu.memory_space<vmem>>, vector<32x1024xf32>
    tpu.vector_store %arg4[%c0_3, %c0_4], %4 {strides = array<i32>} : memref<32x1024xf32, #tpu.memory_space<vmem>>, vector<32x1024xf32>,
    return
  }
  func.func @transform_0(%arg0: i32, %arg1: i32) -> (i32, i32) {
    %c0_i32 = arith.constant 0 : i32
    return %arg0, %arg1 : i32, i32
  }
  func.func @transform_1(%arg0: i32, %arg1: i32) -> (i32, i32) {
    %c0_i32 = arith.constant 0 : i32
    return %arg0, %arg1 : i32, i32
  }
  func.func @transform_2(%arg0: i32, %arg1: i32) -> (i32, i32) {
    %c0_i32 = arith.constant 0 : i32
    return %arg0, %arg1 : i32, i32
  }
}

</mosaic_0001>

<llo_original>
// kernel: tpu_custom_call.1
$region0: #{tpu_custom_call.1}
  #allocation0 [shape = 'u32[]', space=smem, size = 0x4, offset = 0x4, fixed_abs, tag = 'smem constant byte address 0x4 - core index']
  #allocation1 [shape = 'u32[144,128]{1,0:T(1,128)}', space=vmem, size = 0x12000, scoped, tag = 'internal scratch']
  %s0 = inlined_call_operand.hbm [shape: f32[64,1024], index: 0, kind: input, shape index: {}]
  %s1 = inlined_call_operand.hbm [shape: f32[64,1024], index: 1, kind: input, shape index: {}]
  %s2 = inlined_call_operand.hbm [shape: f32[64,1024], index: 2, kind: output, shape index: {}]
  %s3 = sld [smem:[#allocation0]]
  $region49: #{tpu_custom_call.1} parent=0
    _
  %s5 = ssub.s32 1, %s3
  %s6 = scalar_select 0, %s5, %s3
  $region1: #{tpu_custom_call.1} parent=0
    #allocation2 [shape = 'u8[262144]{0}', space=vmem, size = 0x40000, scoped, tag = 'input window, operand 0']
    #allocation3 [shape = 's32[2]{0}', space=sflag, size = 0x8, scoped, tag = 'scoped memory for tpu_custom_call.1']
    #allocation4 [shape = 's32[2]{0}', space=sflag, size = 0x8, scoped, tag = 'scoped memory for tpu_custom_call.1']
    #allocation5 [shape = 'u8[262144]{0}', space=vmem, size = 0x40000, scoped, tag = 'input window, operand 1']
    #allocation6 [shape = 's32[2]{0}', space=sflag, size = 0x8, scoped, tag = 'scoped memory for tpu_custom_call.1']
    #allocation7 [shape = 'u8[262144]{0}', space=vmem, size = 0x40000, scoped, tag = 'output window, operand 0']
    %7 = vsyncpa [#allocation3], 0
    %s8 = scalar_lea.sflag [#allocation3], 1
    %9 = vsyncpa %s8, 0
    %10 = vsyncpa [#allocation6], 0
    %s11 = scalar_lea.sflag [#allocation6], 1
    %12 = vsyncpa %s11, 0
    %13 = vsyncpa [#allocation4], 0
    %s14 = scalar_lea.sflag [#allocation4], 1
    %15 = vsyncpa %s14, 0
    loop: start=0, step=1, limit=4
    $region2: #{tpu_custom_call.1} parent=1 // loop_pre_header
      _
    $region3: #{tpu_custom_call.1} parent=1 // loop_header
      %s17 = sphi 0, %s21
      %p18 = scmp.ge.s32.totalorder %s17, 4
      %s24 = sphi 0, %s36
      %s25 = sphi 0, %s32
      %s26 = sphi 0, %s24
      %s27 = sphi 0, %s25
      %s28 = sphi 0, %s26
      %s29 = sphi 0, %s27
      %s41 = sphi 0, %s43
      %s44 = sphi 0, %s41
      %s45 = sphi 0, %s44
      %s61 = sphi 0, %s45
      %s69 = sphi 0, %s71
      %s72 = sphi 0, %s69
      %s73 = sphi 0, %s72
      %s89 = sphi 0, %s73
      %s97 = sphi 0, %s99
      %s100 = sphi 0, %s97
      %s101 = sphi 0, %s100
      %s117 = sphi 0, %s101
    $region4: #{tpu_custom_call.1} parent=1 // loop_header_branch
      %20 = sbr.rel (%p18) target = $region8
    $region5: #{tpu_custom_call.1} parent=1 // loop_body
      %s22 = ssub.s32 %s17, 1
      %s23 = ssub.s32 %s17, 2
      %s30 = sadd.s32 1, %s25
      %p31 = scmp.ge.s32.totalorder %s30, 1
      %s32 = scalar_select %p31, 0, %s30
      %s33 = sadd.s32 1, %s24
      %s34 = scalar_select %p31, %s33, %s24
      %p35 = scmp.ge.s32.totalorder %s34, 2
      %s36 = scalar_select %p35, 0, %s34
      %s37 = ssub.s32 %s24, %s36
      %s38 = ssub.s32 %s25, %s32
      %s39 = sor.u32 %s37, %s38
      %p40 = scmp.eq.s32.totalorder %s39, 0
      %s42 = sadd.s32 %s41, 1
      %s43 = scalar_select %p40, %s41, %s42
      %p46 = pneg %p40
      %p47 = scmp.eq.s32.totalorder %s17, 1
      %p48 = por %p46, %p47
      %p49 = scmp.ne.s32.totalorder %s41, %s44
      %p50 = scmp.eq.s32.totalorder %s17, 0
      %p51 = por %p49, %p50
      %p52 = scmp.ne.s32.totalorder %s41, %s44
      %p53 = scmp.eq.s32.totalorder %s22, 1
      %p54 = por %p52, %p53
      %p55 = scmp.ne.s32.totalorder %s44, %s45
      %p56 = scmp.eq.s32.totalorder %s22, 0
      %p57 = por %p55, %p56
      %p58 = scmp.ne.s32.totalorder %s44, %s45
      %p59 = scmp.eq.s32.totalorder %s23, 1
      %p60 = por %p58, %p59
      %p62 = scmp.ne.s32.totalorder %s45, %s61
      %p63 = scmp.eq.s32.totalorder %s23, 0
      %p64 = por %p62, %p63
      %s65 = ssub.s32 %s24, %s36
      %s66 = ssub.s32 %s25, %s32
      %s67 = sor.u32 %s65, %s66
      %p68 = scmp.eq.s32.totalorder %s67, 0
      %s70 = sadd.s32 %s69, 1
      %s71 = scalar_select %p68, %s69, %s70
      %p74 = pneg %p68
      %p75 = scmp.eq.s32.totalorder %s17, 1
      %p76 = por %p74, %p75
      %p77 = scmp.ne.s32.totalorder %s69, %s72
      %p78 = scmp.eq.s32.totalorder %s17, 0
      %p79 = por %p77, %p78
      %p80 = scmp.ne.s32.totalorder %s69, %s72
      %p81 = scmp.eq.s32.totalorder %s22, 1
      %p82 = por %p80, %p81
      %p83 = scmp.ne.s32.totalorder %s72, %s73
      %p84 = scmp.eq.s32.totalorder %s22, 0
      %p85 = por %p83, %p84
      %p86 = scmp.ne.s32.totalorder %s72, %s73
      %p87 = scmp.eq.s32.totalorder %s23, 1
      %p88 = por %p86, %p87
      %p90 = scmp.ne.s32.totalorder %s73, %s89
      %p91 = scmp.eq.s32.totalorder %s23, 0
      %p92 = por %p90, %p91
      %s93 = ssub.s32 %s24, %s36
      %s94 = ssub.s32 %s25, %s32
      %s95 = sor.u32 %s93, %s94
      %p96 = scmp.eq.s32.totalorder %s95, 0
      %s98 = sadd.s32 %s97, 1
      %s99 = scalar_select %p96, %s97, %s98
      %p102 = pneg %p96
      %p103 = scmp.eq.s32.totalorder %s17, 1
      %p104 = por %p102, %p103
      %p105 = scmp.ne.s32.totalorder %s97, %s100
      %p106 = scmp.eq.s32.totalorder %s17, 0
      %p107 = por %p105, %p106
      %p108 = scmp.ne.s32.totalorder %s97, %s100
      %p109 = scmp.eq.s32.totalorder %s22, 1
      %p110 = por %p108, %p109
      %p111 = scmp.ne.s32.totalorder %s100, %s101
      %p112 = scmp.eq.s32.totalorder %s22, 0
      %p113 = por %p111, %p112
      %p114 = scmp.ne.s32.totalorder %s100, %s101
      %p115 = scmp.eq.s32.totalorder %s23, 1
      %p116 = por %p114, %p115
      %p118 = scmp.ne.s32.totalorder %s101, %s117
      %p119 = scmp.eq.s32.totalorder %s23, 0
      %p120 = por %p118, %p119
      %p121 = scmp.le.s32.totalorder 1, %s17
      %p122 = scmp.lt.s32.totalorder %s17, 3
      %p123 = pnand %p121, %p122
      %p124 = pneg %p123
      // Predicated region
      $region9: #{tpu_custom_call.1} parent=5 // pred_check
        _
      $region10: #{tpu_custom_call.1} parent=5 // pred_check_branch
        %126 = sbr.rel (%p123) target = $region12
      $region11: #{tpu_custom_call.1} parent=5 // pred_region
        %s127 = ssub.s32 %s17, 1
      $region12: #{tpu_custom_call.1} parent=5 // pred_fallthru
        _
      %p128 = scmp.lt.s32.totalorder %s17, 2
      // Predicated region
      $region13: #{tpu_custom_call.1} parent=5 // pred_check
        %p129 = pneg %p128
      $region14: #{tpu_custom_call.1} parent=5 // pred_check_branch
        %131 = sbr.rel (%p129) target = $region16
      $region15: #{tpu_custom_call.1} parent=5 // pred_region
        // Predicated region
        $region17: #{tpu_custom_call.1} parent=15 // pred_check
          %p132 = pneg %p51
        $region18: #{tpu_custom_call.1} parent=15 // pred_check_branch
          %134 = sbr.rel (%p132) target = $region20
        $region19: #{tpu_custom_call.1} parent=15 // pred_region
          %s135 = sand.u32 %s41, 1
          %s136 = scalar_lea.sflag [#allocation3], %s135
          %s137 = sand.u32 %s41, 1
          %s138 = smul.addr %s137, 256
          %s139 = scalar_lea.vmem [#allocation2], %s138
          %s140 = smul.u32 4, %s24
          %s141 = smul.u32 8, %s25
          %s143 = ssub.s32 4096, 4096
          %144 = vsyncadd %s136, %s143
          %s145 = smul.addr %s140, 8
          %s146 = sadd.s32 %s141, %s145
          %s147 = smul.addr %s146, 128
          %s148 = scalar_lea.hbm %s0, %s147
          %s149 = sshll.u32 %s139, 4
          %s150 = int_to_ptr.vmem [resolvable:$true] %s149
          %155 = dma.hbm_to_vmem [thread:$0]  %s148, 4096, %s150, %s136, 1024, 1024, 64
        $region20: #{tpu_custom_call.1} parent=15 // pred_fallthru
          _
        // Predicated region
        $region21: #{tpu_custom_call.1} parent=15 // pred_check
          %p156 = pneg %p79
        $region22: #{tpu_custom_call.1} parent=15 // pred_check_branch
          %158 = sbr.rel (%p156) target = $region24
        $region23: #{tpu_custom_call.1} parent=15 // pred_region
          %s159 = sand.u32 %s69, 1
          %s160 = scalar_lea.sflag [#allocation6], %s159
          %s161 = sand.u32 %s69, 1
          %s162 = smul.addr %s161, 256
          %s163 = scalar_lea.vmem [#allocation5], %s162
          %s164 = smul.u32 4, %s24
          %s165 = smul.u32 8, %s25
          %s167 = ssub.s32 4096, 4096
          %168 = vsyncadd %s160, %s167
          %s169 = smul.addr %s164, 8
          %s170 = sadd.s32 %s165, %s169
          %s171 = smul.addr %s170, 128
          %s172 = scalar_lea.hbm %s1, %s171
          %s173 = sshll.u32 %s163, 4
          %s174 = int_to_ptr.vmem [resolvable:$true] %s173
          %179 = dma.hbm_to_vmem [thread:$0]  %s172, 4096, %s174, %s160, 1024, 1024, 64
        $region24: #{tpu_custom_call.1} parent=15 // pred_fallthru
          _
      $region16: #{tpu_custom_call.1} parent=5 // pred_fallthru
        _
      %p180 = scmp.le.s32.totalorder 1, %s17
      %p181 = scmp.lt.s32.totalorder %s17, 3
      %p182 = pnand %p180, %p181
      %p183 = pneg %p182
      // Predicated region
      $region25: #{tpu_custom_call.1} parent=5 // pred_check
        _
      $region26: #{tpu_custom_call.1} parent=5 // pred_check_branch
        %185 = sbr.rel (%p182) target = $region28
      $region27: #{tpu_custom_call.1} parent=5 // pred_region
        %s186 = ssub.s32 %s17, 1
        %s187 = sand.u32 %s44, 1
        %s188 = scalar_lea.sflag [#allocation3], %s187
        %s189 = sand.u32 %s44, 1
        %s190 = smul.addr %s189, 256
        %s191 = scalar_lea.vmem [#allocation2], %s190
        // Predicated region
        $region29: #{tpu_custom_call.1} parent=27 // pred_check
          %p192 = pneg %p57
        $region30: #{tpu_custom_call.1} parent=27 // pred_check_branch
          %194 = sbr.rel (%p192) target = $region32
        $region31: #{tpu_custom_call.1} parent=27 // pred_region
          %195 = dma.done %s188, 4096
        $region32: #{tpu_custom_call.1} parent=27 // pred_fallthru
          _
        %s196 = sand.u32 %s72, 1
        %s197 = scalar_lea.sflag [#allocation6], %s196
        %s198 = sand.u32 %s72, 1
        %s199 = smul.addr %s198, 256
        %s200 = scalar_lea.vmem [#allocation5], %s199
        // Predicated region
        $region33: #{tpu_custom_call.1} parent=27 // pred_check
          %p201 = pneg %p85
        $region34: #{tpu_custom_call.1} parent=27 // pred_check_branch
          %203 = sbr.rel (%p201) target = $region36
        $region35: #{tpu_custom_call.1} parent=27 // pred_region
          %204 = dma.done %s197, 4096
        $region36: #{tpu_custom_call.1} parent=27 // pred_fallthru
          _
        %s205 = sand.u32 %s44, 1
        %s206 = scalar_lea.sflag [#allocation3], %s205
        %s207 = sand.u32 %s44, 1
        %s208 = smul.addr %s207, 256
        %s209 = scalar_lea.vmem [#allocation2], %s208
        %p210 = pneg %p57
        %p211 = pneg %p54
        %s212 = sand.u32 %s72, 1
        %s213 = scalar_lea.sflag [#allocation6], %s212
        %s214 = sand.u32 %s72, 1
        %s215 = smul.addr %s214, 256
        %s216 = scalar_lea.vmem [#allocation5], %s215
        %p217 = pneg %p85
        %p218 = pneg %p82
        %p219 = pneg %p113
        %p220 = pneg %p110
        %s221 = sand.u32 %s100, 1
        %s222 = scalar_lea.sflag [#allocation4], %s221
        %s223 = sand.u32 %s100, 1
        %s224 = smul.addr %s223, 256
        %s225 = scalar_lea.vmem [#allocation7], %s224
        %s226 = smul.u32 4, %s26
        %s227 = smul.u32 8, %s27
        %s228 = smul.u32 4, %s26
        %s229 = smul.u32 8, %s27
        %s230 = smul.u32 4, %s26
        %s231 = smul.u32 8, %s27
        %v232 = vld [vmem:[%s191] sm:$0xff]
        %v233 = vld [vmem:[%s191 + $0x8] sm:$0xff]
        %v234 = vld [vmem:[%s191 + $0x10] sm:$0xff]
        %v235 = vld [vmem:[%s191 + $0x18] sm:$0xff]
        %v236 = vld [vmem:[%s191 + $0x20] sm:$0xff]
        %v237 = vld [vmem:[%s191 + $0x28] sm:$0xff]
        %v238 = vld [vmem:[%s191 + $0x30] sm:$0xff]
        %v239 = vld [vmem:[%s191 + $0x38] sm:$0xff]
        %v240 = vld [vmem:[%s191 + $0x40] sm:$0xff]
        %v241 = vld [vmem:[%s191 + $0x48] sm:$0xff]
        %v242 = vld [vmem:[%s191 + $0x50] sm:$0xff]
        %v243 = vld [vmem:[%s191 + $0x58] sm:$0xff]
        %v244 = vld [vmem:[%s191 + $0x60] sm:$0xff]
        %v245 = vld [vmem:[%s191 + $0x68] sm:$0xff]
        %v246 = vld [vmem:[%s191 + $0x70] sm:$0xff]
        %v247 = vld [vmem:[%s191 + $0x78] sm:$0xff]
        %v248 = vld [vmem:[%s191 + $0x80] sm:$0xff]
        %v249 = vld [vmem:[%s191 + $0x88] sm:$0xff]
        %v250 = vld [vmem:[%s191 + $0x90] sm:$0xff]
        %v251 = vld [vmem:[%s191 + $0x98] sm:$0xff]
        %v252 = vld [vmem:[%s191 + $0xa0] sm:$0xff]
        %v253 = vld [vmem:[%s191 + $0xa8] sm:$0xff]
        %v254 = vld [vmem:[%s191 + $0xb0] sm:$0xff]
        %v255 = vld [vmem:[%s191 + $0xb8] sm:$0xff]
        %v256 = vld [vmem:[%s191 + $0xc0] sm:$0xff]
        %v257 = vld [vmem:[%s191 + $0xc8] sm:$0xff]
        %v258 = vld [vmem:[%s191 + $0xd0] sm:$0xff]
        %v259 = vld [vmem:[%s191 + $0xd8] sm:$0xff]
        %v260 = vld [vmem:[%s191 + $0xe0] sm:$0xff]
        %v261 = vld [vmem:[%s191 + $0xe8] sm:$0xff]
        %v262 = vld [vmem:[%s191 + $0xf0] sm:$0xff]
        %v263 = vld [vmem:[%s191 + $0xf8] sm:$0xff]
        %v264 = vld [vmem:[%s200] sm:$0xff]
        %v265 = vld [vmem:[%s200 + $0x8] sm:$0xff]
        %v266 = vld [vmem:[%s200 + $0x10] sm:$0xff]
        %v267 = vld [vmem:[%s200 + $0x18] sm:$0xff]
        %v268 = vld [vmem:[%s200 + $0x20] sm:$0xff]
        %v269 = vld [vmem:[%s200 + $0x28] sm:$0xff]
        %v270 = vld [vmem:[%s200 + $0x30] sm:$0xff]
        %v271 = vld [vmem:[%s200 + $0x38] sm:$0xff]
        %v272 = vld [vmem:[%s200 + $0x40] sm:$0xff]
        %v273 = vld [vmem:[%s200 + $0x48] sm:$0xff]
        %v274 = vld [vmem:[%s200 + $0x50] sm:$0xff]
        %v275 = vld [vmem:[%s200 + $0x58] sm:$0xff]
        %v276 = vld [vmem:[%s200 + $0x60] sm:$0xff]
        %v277 = vld [vmem:[%s200 + $0x68] sm:$0xff]
        %v278 = vld [vmem:[%s200 + $0x70] sm:$0xff]
        %v279 = vld [vmem:[%s200 + $0x78] sm:$0xff]
        %v280 = vld [vmem:[%s200 + $0x80] sm:$0xff]
        %v281 = vld [vmem:[%s200 + $0x88] sm:$0xff]
        %v282 = vld [vmem:[%s200 + $0x90] sm:$0xff]
        %v283 = vld [vmem:[%s200 + $0x98] sm:$0xff]
        %v284 = vld [vmem:[%s200 + $0xa0] sm:$0xff]
        %v285 = vld [vmem:[%s200 + $0xa8] sm:$0xff]
        %v286 = vld [vmem:[%s200 + $0xb0] sm:$0xff]
        %v287 = vld [vmem:[%s200 + $0xb8] sm:$0xff]
        %v288 = vld [vmem:[%s200 + $0xc0] sm:$0xff]
        %v289 = vld [vmem:[%s200 + $0xc8] sm:$0xff]
        %v290 = vld [vmem:[%s200 + $0xd0] sm:$0xff]
        %v291 = vld [vmem:[%s200 + $0xd8] sm:$0xff]
        %v292 = vld [vmem:[%s200 + $0xe0] sm:$0xff]
        %v293 = vld [vmem:[%s200 + $0xe8] sm:$0xff]
        %v294 = vld [vmem:[%s200 + $0xf0] sm:$0xff]
        %v295 = vld [vmem:[%s200 + $0xf8] sm:$0xff]
        %v296 = vadd.f32 %v232, 1e-07
        %v297 = vadd.f32 %v233, 1e-07
        %v298 = vadd.f32 %v234, 1e-07
        %v299 = vadd.f32 %v235, 1e-07
        %v300 = vadd.f32 %v236, 1e-07
        %v301 = vadd.f32 %v237, 1e-07
        %v302 = vadd.f32 %v238, 1e-07
        %v303 = vadd.f32 %v239, 1e-07
        %v304 = vadd.f32 %v240, 1e-07
        %v305 = vadd.f32 %v241, 1e-07
        %v306 = vadd.f32 %v242, 1e-07
        %v307 = vadd.f32 %v243, 1e-07
        %v308 = vadd.f32 %v244, 1e-07
        %v309 = vadd.f32 %v245, 1e-07
        %v310 = vadd.f32 %v246, 1e-07
        %v311 = vadd.f32 %v247, 1e-07
        %v312 = vadd.f32 %v248, 1e-07
        %v313 = vadd.f32 %v249, 1e-07
        %v314 = vadd.f32 %v250, 1e-07
        %v315 = vadd.f32 %v251, 1e-07
        %v316 = vadd.f32 %v252, 1e-07
        %v317 = vadd.f32 %v253, 1e-07
        %v318 = vadd.f32 %v254, 1e-07
        %v319 = vadd.f32 %v255, 1e-07
        %v320 = vadd.f32 %v256, 1e-07
        %v321 = vadd.f32 %v257, 1e-07
        %v322 = vadd.f32 %v258, 1e-07
        %v323 = vadd.f32 %v259, 1e-07
        %v324 = vadd.f32 %v260, 1e-07
        %v325 = vadd.f32 %v261, 1e-07
        %v326 = vadd.f32 %v262, 1e-07
        %v327 = vadd.f32 %v263, 1e-07
        %v328 = vmul.f32 %v296, %v264
        %v329 = vmul.f32 %v297, %v265
        %v330 = vmul.f32 %v298, %v266
        %v331 = vmul.f32 %v299, %v267
        %v332 = vmul.f32 %v300, %v268
        %v333 = vmul.f32 %v301, %v269
        %v334 = vmul.f32 %v302, %v270
        %v335 = vmul.f32 %v303, %v271
        %v336 = vmul.f32 %v304, %v272
        %v337 = vmul.f32 %v305, %v273
        %v338 = vmul.f32 %v306, %v274
        %v339 = vmul.f32 %v307, %v275
        %v340 = vmul.f32 %v308, %v276
        %v341 = vmul.f32 %v309, %v277
        %v342 = vmul.f32 %v310, %v278
        %v343 = vmul.f32 %v311, %v279
        %v344 = vmul.f32 %v312, %v280
        %v345 = vmul.f32 %v313, %v281
        %v346 = vmul.f32 %v314, %v282
        %v347 = vmul.f32 %v315, %v283
        %v348 = vmul.f32 %v316, %v284
        %v349 = vmul.f32 %v317, %v285
        %v350 = vmul.f32 %v318, %v286
        %v351 = vmul.f32 %v319, %v287
        %v352 = vmul.f32 %v320, %v288
        %v353 = vmul.f32 %v321, %v289
        %v354 = vmul.f32 %v322, %v290
        %v355 = vmul.f32 %v323, %v291
        %v356 = vmul.f32 %v324, %v292
        %v357 = vmul.f32 %v325, %v293
        %v358 = vmul.f32 %v326, %v294
        %v359 = vmul.f32 %v327, %v295
        %360 = vst [vmem:[%s225] sm:$0xff] %v328
        %361 = vst [vmem:[%s225 + $0x8] sm:$0xff] %v329
        %362 = vst [vmem:[%s225 + $0x10] sm:$0xff] %v330
        %363 = vst [vmem:[%s225 + $0x18] sm:$0xff] %v331
        %364 = vst [vmem:[%s225 + $0x20] sm:$0xff] %v332
        %365 = vst [vmem:[%s225 + $0x28] sm:$0xff] %v333
        %366 = vst [vmem:[%s225 + $0x30] sm:$0xff] %v334
        %367 = vst [vmem:[%s225 + $0x38] sm:$0xff] %v335
        %368 = vst [vmem:[%s225 + $0x40] sm:$0xff] %v336
        %369 = vst [vmem:[%s225 + $0x48] sm:$0xff] %v337
        %370 = vst [vmem:[%s225 + $0x50] sm:$0xff] %v338
        %371 = vst [vmem:[%s225 + $0x58] sm:$0xff] %v339
        %372 = vst [vmem:[%s225 + $0x60] sm:$0xff] %v340
        %373 = vst [vmem:[%s225 + $0x68] sm:$0xff] %v341
        %374 = vst [vmem:[%s225 + $0x70] sm:$0xff] %v342
        %375 = vst [vmem:[%s225 + $0x78] sm:$0xff] %v343
        %376 = vst [vmem:[%s225 + $0x80] sm:$0xff] %v344
        %377 = vst [vmem:[%s225 + $0x88] sm:$0xff] %v345
        %378 = vst [vmem:[%s225 + $0x90] sm:$0xff] %v346
        %379 = vst [vmem:[%s225 + $0x98] sm:$0xff] %v347
        %380 = vst [vmem:[%s225 + $0xa0] sm:$0xff] %v348
        %381 = vst [vmem:[%s225 + $0xa8] sm:$0xff] %v349
        %382 = vst [vmem:[%s225 + $0xb0] sm:$0xff] %v350
        %383 = vst [vmem:[%s225 + $0xb8] sm:$0xff] %v351
        %384 = vst [vmem:[%s225 + $0xc0] sm:$0xff] %v352
        %385 = vst [vmem:[%s225 + $0xc8] sm:$0xff] %v353
        %386 = vst [vmem:[%s225 + $0xd0] sm:$0xff] %v354
        %387 = vst [vmem:[%s225 + $0xd8] sm:$0xff] %v355
        %388 = vst [vmem:[%s225 + $0xe0] sm:$0xff] %v356
        %389 = vst [vmem:[%s225 + $0xe8] sm:$0xff] %v357
        %390 = vst [vmem:[%s225 + $0xf0] sm:$0xff] %v358
        %391 = vst [vmem:[%s225 + $0xf8] sm:$0xff] %v359
        %s392 = sand.u32 %s100, 1
        %s393 = scalar_lea.sflag [#allocation4], %s392
        %s394 = sand.u32 %s100, 1
        %s395 = smul.addr %s394, 256
        %s396 = scalar_lea.vmem [#allocation7], %s395
        // Predicated region
        $region37: #{tpu_custom_call.1} parent=27 // pred_check
          %p397 = pneg %p110
        $region38: #{tpu_custom_call.1} parent=27 // pred_check_branch
          %399 = sbr.rel (%p397) target = $region40
        $region39: #{tpu_custom_call.1} parent=27 // pred_region
          %s400 = smul.u32 4, %s26
          %s401 = smul.u32 8, %s27
          %s403 = ssub.s32 4096, 4096
          %404 = vsyncadd %s393, %s403
          %s405 = smul.addr %s400, 8
          %s406 = sadd.s32 %s401, %s405
          %s407 = smul.addr %s406, 128
          %s408 = scalar_lea.hbm %s2, %s407
          %s409 = sshll.u32 %s396, 4
          %s410 = int_to_ptr.vmem [resolvable:$true] %s409
          %415 = dma.vmem_to_hbm [thread:$0]  %s410, 4096, %s408, %s393, 1024, 1024, 64
        $region40: #{tpu_custom_call.1} parent=27 // pred_fallthru
          _
      $region28: #{tpu_custom_call.1} parent=5 // pred_fallthru
        _
      %p416 = scmp.le.s32.totalorder 2, %s17
      // Predicated region
      $region41: #{tpu_custom_call.1} parent=5 // pred_check
        %p417 = pneg %p416
      $region42: #{tpu_custom_call.1} parent=5 // pred_check_branch
        %419 = sbr.rel (%p417) target = $region44
      $region43: #{tpu_custom_call.1} parent=5 // pred_region
        %s420 = ssub.s32 %s17, 2
        // Predicated region
        $region45: #{tpu_custom_call.1} parent=43 // pred_check
          %p421 = pneg %p116
        $region46: #{tpu_custom_call.1} parent=43 // pred_check_branch
          %423 = sbr.rel (%p421) target = $region48
        $region47: #{tpu_custom_call.1} parent=43 // pred_region
          %s424 = sand.u32 %s101, 1
          %s425 = scalar_lea.sflag [#allocation4], %s424
          %s426 = sand.u32 %s101, 1
          %s427 = smul.addr %s426, 256
          %s428 = scalar_lea.vmem [#allocation7], %s427
          %429 = dma.done %s425, 4096
        $region48: #{tpu_custom_call.1} parent=43 // pred_fallthru
          _
      $region44: #{tpu_custom_call.1} parent=5 // pred_fallthru
        _
    $region6: #{tpu_custom_call.1} parent=1 // loop_footer
      %s21 = sadd.s32 1, %s17
    $region7: #{tpu_custom_call.1} parent=1 // loop_footer_branch
      %16 = sbr.rel target = $region3
    $region8: #{tpu_custom_call.1} parent=1 // loop_exit
      _
    %430 = vsyncpa [#allocation3], 1
    %s431 = scalar_lea.sflag [#allocation3], 1
    %432 = vsyncpa %s431, 1
    %433 = vsyncpa [#allocation6], 1
    %s434 = scalar_lea.sflag [#allocation6], 1
    %435 = vsyncpa %s434, 1
    %436 = vsyncpa [#allocation4], 1
    %s437 = scalar_lea.sflag [#allocation4], 1
    %438 = vsyncpa %s437, 1

</llo_original>
